<compile_context>
chip_gen: v5e
topology: v5e:2x2
jax: 0.10.0
libtpu: 0.0.40
codegen_flags: <defaults>
</compile_context>

<pallas_src>
import functools
import math

import jax
import jax.numpy as jnp
import numpy as np
from jax.experimental import pallas as pl
from jax.experimental.pallas import tpu as pltpu


# ----------------------------- kernel -------------------------------------

def embeddings_kernel(qxm_ref, emb2_ref, w2_ref, b2_ref, out_ref):
    # qxm_ref:  (TILE, F+2) f32   columns = [mask, item_idx (as f32), q features ...]
    # emb2_ref: (n_items, d) f32  fused table  scale * emb @ Wj[:, :d]^T (row 0 is zero)
    # w2_ref:   (F+2, d)   f32    fused linear [0; 0; Wf^T @ Wj[:, d:]^T]
    # b2_ref:   (1, d)     f32    fused bias   bf @ Wj[:, d:]^T + bj
    # out_ref:  (TILE, d)  f32
    n_items = emb2_ref.shape[0]
    tile = qxm_ref.shape[0]

    qxm = qxm_ref[...]                                   # (TILE, F+2)
    mask = qxm[:, 0:1]                                   # (TILE, 1)
    idx = qxm[:, 1:2].astype(jnp.int32)                  # (TILE, 1) exact int round-trip

    # item-embedding "gather" as a one-hot MXU matmul against the fused table.
    iota = jax.lax.broadcasted_iota(jnp.int32, (tile, n_items), 1)
    onehot = (iota == idx).astype(jnp.float32)           # (TILE, n_items)
    z2 = jnp.dot(onehot, emb2_ref[...], preferred_element_type=jnp.float32)

    # fused feats_embed + joint_embed; the two leading zero rows of W2 make the
    # [mask, idx] columns of qxm inert, so no slicing is needed before the matmul.
    qw = jnp.dot(qxm, w2_ref[...], preferred_element_type=jnp.float32)

    e = z2 + qw + b2_ref[...]
    out_ref[...] = (e * mask).astype(out_ref.dtype)


# ----------------------------- wrapper -------------------------------------

def embeddings_forward(x, q, mask, params, *, scale=True, tile=256):
    """x: (B, L) int32, q: (B, L, F) f32, mask: (B, L) f32 -> (B, L, d) f32."""
    emb, wf, bf, wj, bj = params
    B, L = x.shape
    F = q.shape[-1]
    n_items, d = emb.shape
    N = B * L

    hi = jax.lax.Precision.HIGHEST

    # ---- one-time algebraic fusion (plain XLA, O(n_items * d^2)) ----
    scale_val = float(d) ** 0.5 if scale else 1.0
    wjz_t = wj[:, :d].T                                   # (d, d)
    wjq_t = wj[:, d:].T                                   # (g, d)
    emb2 = jnp.dot(scale_val * emb, wjz_t, precision=hi)  # (n_items, d); row 0 stays 0
    w2 = jnp.dot(wf.T, wjq_t, precision=hi)               # (F, d)
    b2 = (jnp.dot(bf, wjq_t, precision=hi) + bj).reshape(1, d)
    w2_aug = jnp.concatenate([jnp.zeros((2, d), w2.dtype), w2], axis=0)   # (F+2, d)

    # ---- pack mask + idx + features into a single lane-packed input array ----
    qxm = jnp.concatenate(
        [mask.reshape(N, 1).astype(jnp.float32),
         x.reshape(N, 1).astype(jnp.float32),
         q.reshape(N, F).astype(jnp.float32)],
        axis=1)                                           # (N, F+2)

    # ---- row tiling: large tiles, pad N up to a multiple of the tile ----
    tile_eff = max(8, min(int(tile), -(-N // 8) * 8))
    tile_eff = (tile_eff // 8) * 8
    n_pad = (-N) % tile_eff
    if n_pad:
        # padded rows: mask=0, idx=0 (padding row of emb2), q=0  ->  output rows are 0
        qxm = jnp.pad(qxm, ((0, n_pad), (0, 0)))
    Np = N + n_pad
    grid = (Np // tile_eff,)

    out = pl.pallas_call(
        embeddings_kernel,
        out_shape=jax.ShapeDtypeStruct((Np, d), jnp.float32),
        grid_spec=pltpu.PrefetchScalarGridSpec(
            num_scalar_prefetch=0,
            grid=grid,
            in_specs=[
                pl.BlockSpec((tile_eff, F + 2), lambda i: (i, 0)),   # [mask|idx|q] rows
                pl.BlockSpec((n_items, d), lambda i: (0, 0)),        # fused emb table
                pl.BlockSpec((F + 2, d), lambda i: (0, 0)),          # fused linear
                pl.BlockSpec((1, d), lambda i: (0, 0)),              # fused bias
            ],
            out_specs=pl.BlockSpec((tile_eff, d), lambda i: (i, 0)),
        ),
        compiler_params=pltpu.CompilerParams(
            dimension_semantics=("parallel",),
            # >= default on all generations (raises v5e's 16 MiB default); the
            # resident fused table + double-buffered row blocks fit comfortably.
            vmem_limit_bytes=32 * 1024 * 1024),
    )(qxm, emb2, w2_aug, b2)

    return out[:N].reshape(B, L, d)


# ------------------------ deterministic params ------------------------------

def init_params(key, n_items, d, g, n_ctx, n_attrs):
    F = n_ctx + n_attrs
    k1, k2, k3 = jax.random.split(key, 3)

    # nn.Embedding weight: xavier_uniform_, then zero padding_idx row 0
    bound = math.sqrt(6.0 / (n_items + d))
    emb = jax.random.uniform(k1, (n_items, d), jnp.float32, -bound, bound)
    emb = emb.at[0].set(0.0)

    # feats_embed: Linear(F, g), weight (g, F) ~ N(0, 0.01), bias zeros
    wf = 0.01 * jax.random.normal(k2, (g, F), jnp.float32)
    bf = jnp.zeros((g,), jnp.float32)

    # joint_embed: Linear(g + d, d), weight (d, d + g) ~ N(0, 0.01), bias zeros
    wj = 0.01 * jax.random.normal(k3, (d, d + g), jnp.float32)
    bj = jnp.zeros((d,), jnp.float32)

    return emb, wf, bf, wj, bj


# ------------------------ pure-JAX reference (unfused) -----------------------

def embeddings_ref(x, q, mask, params, *, scale=True):
    emb, wf, bf, wj, bj = params
    d = emb.shape[1]
    hi = jax.lax.Precision.HIGHEST
    qe = jnp.dot(q, wf.T, precision=hi) + bf
    z = emb[x]
    if scale:
        z = z * d ** 0.5
    e = jnp.dot(jnp.concatenate([z, qe], axis=-1), wj.T, precision=hi) + bj
    return e * mask[..., None]


# ----------------------------- main -----------------------------------------

if __name__ == "__main__":
    n_items, d, g, n_ctx, n_attrs = 64, 32, 16, 6, 5
    F = n_ctx + n_attrs

    key = jax.random.PRNGKey(0)
    kp, kx, kq, km = jax.random.split(key, 4)
    params = init_params(kp, n_items, d, g, n_ctx, n_attrs)

    # small shapes consistent with the module
    B, L = 2, 8
    x = jax.random.randint(kx, (B, L), 0, n_items, dtype=jnp.int32)  # may include padding idx 0
    q = jax.random.normal(kq, (B, L, F), jnp.float32)
    mask = (jax.random.uniform(km, (B, L)) > 0.3).astype(jnp.float32)

    out = embeddings_forward(x, q, mask, params, scale=True, tile=256)
    out = jax.block_until_ready(out)
    ref = embeddings_ref(x, q, mask, params, scale=True)
    assert out.shape == (B, L, d) and out.dtype == jnp.float32
    np.testing.assert_allclose(np.asarray(out), np.asarray(ref), rtol=2e-5, atol=2e-5)

    # second check: exercises the multi-step grid and row-padding path
    kx2, kq2, km2 = jax.random.split(jax.random.PRNGKey(1), 3)
    B2, L2 = 4, 100                      # N=400 -> tile=256, padded to 512, grid=(2,)
    x2 = jax.random.randint(kx2, (B2, L2), 0, n_items, dtype=jnp.int32)
    q2 = jax.random.normal(kq2, (B2, L2, F), jnp.float32)
    m2 = (jax.random.uniform(km2, (B2, L2)) > 0.3).astype(jnp.float32)
    out2 = jax.block_until_ready(
        embeddings_forward(x2, q2, m2, params, scale=True, tile=256))
    ref2 = embeddings_ref(x2, q2, m2, params, scale=True)
    np.testing.assert_allclose(np.asarray(out2), np.asarray(ref2), rtol=2e-5, atol=2e-5)

    print("KERNEL_OK")
</pallas_src>

<mosaic_0001>
module attributes {stable_mosaic.version = 11 : i64} {
  func.func @embeddings_kernel(%arg0: i32, %arg1: memref<16x13xf32, #tpu.memory_space<vmem>>, %arg2: memref<64x32xf32, #tpu.memory_space<vmem>>, %arg3: memref<13x32xf32, #tpu.memory_space<vmem>>, %arg4: memref<1x32xf32, #tpu.memory_space<vmem>>, %arg5: memref<16x32xf32, #tpu.memory_space<vmem>>) attributes {dimension_semantics = [#tpu.dimension_semantics<parallel>], iteration_bounds = array<i64: 1>, scalar_prefetch = 0 : i64, scratch_operands = 0 : i64, tpu.core_type = #tpu.core_type<tc>, window_params = [{transform_indices = @transform_0, window_bounds = array<i64: 16, 13>}, {pipeline_mode = #tpu.pipeline_mode<synchronous>, transform_indices = @transform_1, window_bounds = array<i64: 64, 32>}, {pipeline_mode = #tpu.pipeline_mode<synchronous>, transform_indices = @transform_2, window_bounds = array<i64: 13, 32>}, {pipeline_mode = #tpu.pipeline_mode<synchronous>, transform_indices = @transform_3, window_bounds = array<i64: 1, 32>}, {transform_indices = @transform_4, window_bounds = array<i64: 16, 32>}]} {
    %c0 = arith.constant 0 : index
    %c0_0 = arith.constant 0 : index
    %0 = vector.load %arg1[%c0, %c0_0] : memref<16x13xf32, #tpu.memory_space<vmem>>, vector<16x13xf32>
    %1 = vector.extract_strided_slice %0 {offsets = [0, 0], sizes = [16, 1], strides = [1, 1]} : vector<16x13xf32> to vector<16x1xf32>
    %2 = vector.extract_strided_slice %0 {offsets = [0, 1], sizes = [16, 1], strides = [1, 1]} : vector<16x13xf32> to vector<16x1xf32>
    %3 = arith.fptosi %2 : vector<16x1xf32> to vector<16x1xi32>
    %4 = tpu.iota {dimensions = array<i32: 1>} : vector<16x64xi32>
    %5 = vector.broadcast %3 : vector<16x1xi32> to vector<16x64xi32>
    %6 = arith.cmpi eq, %4, %5 : vector<16x64xi32>
    %7 = arith.extui %6 : vector<16x64xi1> to vector<16x64xi32>
    %8 = arith.sitofp %7 : vector<16x64xi32> to vector<16x64xf32>
    %c0_1 = arith.constant 0 : index
    %c0_2 = arith.constant 0 : index
    %9 = vector.load %arg2[%c0_1, %c0_2] : memref<64x32xf32, #tpu.memory_space<vmem>>, vector<64x32xf32>
    %cst = arith.constant dense<0.000000e+00> : vector<16x32xf32>
    %10 = tpu.matmul %8, %9, %cst {dimension_numbers = #tpu.dot_dimension_numbers<[1], [0], [0], [1], [0, 0, 1, 1], [], []>} : vector<16x64xf32>, vector<64x32xf32>, vector<16x32xf32> -> vector<16x32xf32>
    %c0_3 = arith.constant 0 : index
    %c0_4 = arith.constant 0 : index
    %11 = vector.load %arg3[%c0_3, %c0_4] : memref<13x32xf32, #tpu.memory_space<vmem>>, vector<13x32xf32>
    %cst_5 = arith.constant dense<0.000000e+00> : vector<16x32xf32>
    %12 = tpu.matmul %0, %11, %cst_5 {dimension_numbers = #tpu.dot_dimension_numbers<[1], [0], [0], [1], [0, 0, 1, 1], [], []>} : vector<16x13xf32>, vector<13x32xf32>, vector<16x32xf32> -> vector<16x32xf32>
    %13 = arith.addf %10, %12 : vector<16x32xf32>
    %c0_6 = arith.constant 0 : index
    %c0_7 = arith.constant 0 : index
    %14 = vector.load %arg4[%c0_6, %c0_7] : memref<1x32xf32, #tpu.memory_space<vmem>>, vector<1x32xf32>
    %15 = vector.broadcast %14 : vector<1x32xf32> to vector<16x32xf32>
    %16 = arith.addf %13, %15 : vector<16x32xf32>
    %17 = vector.broadcast %1 : vector<16x1xf32> to vector<16x32xf32>
    %18 = arith.mulf %16, %17 : vector<16x32xf32>
    %c0_8 = arith.constant 0 : index
    %c0_9 = arith.constant 0 : index
    %19 = vector.load %arg5[%c0_8, %c0_9] : memref<16x32xf32, #tpu.memory_space<vmem>>, vector<16x32xf32>
    tpu.vector_store %arg5[%c0_8, %c0_9], %18 {strides = array<i32>} : memref<16x32xf32, #tpu.memory_space<vmem>>, vector<16x32xf32>,
    return
  }
  func.func @transform_0(%arg0: i32) -> (i32, i32) {
    %c0_i32 = arith.constant 0 : i32
    %c0_i32_0 = arith.constant 0 : i32
    return %arg0, %c0_i32 : i32, i32
  }
  func.func @transform_1(%arg0: i32) -> (i32, i32) {
    %c0_i32 = arith.constant 0 : i32
    %c0_i32_0 = arith.constant 0 : i32
    %c0_i32_1 = arith.constant 0 : i32
    return %c0_i32, %c0_i32_0 : i32, i32
  }
  func.func @transform_2(%arg0: i32) -> (i32, i32) {
    %c0_i32 = arith.constant 0 : i32
    %c0_i32_0 = arith.constant 0 : i32
    %c0_i32_1 = arith.constant 0 : i32
    return %c0_i32, %c0_i32_0 : i32, i32
  }
  func.func @transform_3(%arg0: i32) -> (i32, i32) {
    %c0_i32 = arith.constant 0 : i32
    %c0_i32_0 = arith.constant 0 : i32
    %c0_i32_1 = arith.constant 0 : i32
    return %c0_i32, %c0_i32_0 : i32, i32
  }
  func.func @transform_4(%arg0: i32) -> (i32, i32) {
    %c0_i32 = arith.constant 0 : i32
    %c0_i32_0 = arith.constant 0 : i32
    return %arg0, %c0_i32 : i32, i32
  }
}

</mosaic_0001>

<llo_original>
// kernel: tpu_custom_call.1
$region0: #{tpu_custom_call.1}
  #allocation0 [shape = 'u32[]', space=smem, size = 0x4, offset = 0x4, fixed_abs, tag = 'smem constant byte address 0x4 - core index']
  #allocation1 [shape = 'u32[72,128]{1,0:T(1,128)}', space=vmem, size = 0x9000, scoped, tag = 'internal scratch']
  %s0 = inlined_call_operand.vmem [shape: f32[16,13], index: 0, kind: input, shape index: {}]
  %s1 = inlined_call_operand.vmem [shape: f32[64,32], index: 1, kind: input, shape index: {}]
  %s2 = inlined_call_operand.vmem [shape: f32[13,32], index: 2, kind: input, shape index: {}]
  %s3 = inlined_call_operand.vmem [shape: f32[1,32], index: 3, kind: input, shape index: {}]
  %s4 = inlined_call_operand.hbm [shape: f32[16,32], index: 4, kind: output, shape index: {}]
  %s5 = sld [smem:[#allocation0]]
  $region26: #{tpu_custom_call.1} parent=0
    _
  %s7 = ssub.s32 1, %s5
  %s8 = scalar_select 0, %s7, %s5
  $region1: #{tpu_custom_call.1} parent=0
    #allocation2 [shape = 'u8[8192]{0}', space=vmem, size = 0x2000, scoped, tag = 'output window, operand 0, single buffered']
    #allocation3 [shape = 's32[1]{0}', space=sflag, size = 0x4, scoped, tag = 'scoped memory for tpu_custom_call.1']
    %9 = vsyncpa [#allocation3], 0
    // Predicated region
    $region2: #{tpu_custom_call.1} parent=1 // pred_check
      _
    $region3: #{tpu_custom_call.1} parent=1 // pred_check_branch
      %11 = sbr.rel (0) target = $region5
    $region4: #{tpu_custom_call.1} parent=1 // pred_region
      _
    $region5: #{tpu_custom_call.1} parent=1 // pred_fallthru
      _
    // Predicated region
    $region6: #{tpu_custom_call.1} parent=1 // pred_check
      _
    $region7: #{tpu_custom_call.1} parent=1 // pred_check_branch
      %13 = sbr.rel (0) target = $region9
    $region8: #{tpu_custom_call.1} parent=1 // pred_region
      _
    $region9: #{tpu_custom_call.1} parent=1 // pred_fallthru
      _
    // Predicated region
    $region10: #{tpu_custom_call.1} parent=1 // pred_check
      _
    $region11: #{tpu_custom_call.1} parent=1 // pred_check_branch
      %15 = sbr.rel (0) target = $region13
    $region12: #{tpu_custom_call.1} parent=1 // pred_region
      _
    $region13: #{tpu_custom_call.1} parent=1 // pred_fallthru
      _
    // Predicated region
    $region14: #{tpu_custom_call.1} parent=1 // pred_check
      _
    $region15: #{tpu_custom_call.1} parent=1 // pred_check_branch
      %17 = sbr.rel (0) target = $region17
    $region16: #{tpu_custom_call.1} parent=1 // pred_region
      _
    $region17: #{tpu_custom_call.1} parent=1 // pred_fallthru
      _
    %v18 = vld [vmem:[%s0] sm:$0xff]
    %v19 = vld [vmem:[%s0 + $0x8] sm:$0xff]
    %v20 = vcvt.f32.s32.to.zero.pseudo %v18
    %v21 = vcvt.f32.s32.to.zero.pseudo %v19
    %v22 = vlaneseq
    %v23 = vand.u32 %v22, 127
    %24 = vset.pattern.permute.xlu0 1
    %25 = vperm.xlu0 %24, %v20
    %v26 = vpop.permute.xlu0 %25
    %27 = vset.pattern.permute.xlu0 1
    %28 = vperm.xlu0 %27, %v21
    %v29 = vpop.permute.xlu0 %28
    %vm30 = vcmp.eq.s32.totalorder %v23, %v26
    %vm31 = vcmp.eq.s32.totalorder %v23, %v29
    %v32 = vsel %vm30, 1, 0
    %v33 = vsel %vm31, 1, 0
    %v34 = vcvt.s32.f32 %v32
    %v35 = vcvt.s32.f32 %v33
    %v36 = vld [vmem:[%s1] sm:$0xff]
    %v37 = vld [vmem:[%s1 + $0x8] sm:$0xff]
    %v38 = vld [vmem:[%s1 + $0x10] sm:$0xff]
    %v39 = vld [vmem:[%s1 + $0x18] sm:$0xff]
    %v40 = vld [vmem:[%s1 + $0x20] sm:$0xff]
    %v41 = vld [vmem:[%s1 + $0x28] sm:$0xff]
    %v42 = vld [vmem:[%s1 + $0x30] sm:$0xff]
    %v43 = vld [vmem:[%s1 + $0x38] sm:$0xff]
    %v44 = vld [vmem:[%s2] sm:$0xff]
    %v45 = vld [vmem:[%s2 + $0x8] sm:$0x1f]
    %vm46 = vcmask 105472
    %v48 = vsel %vm46, %v18, 0
    %v51 = vsel %vm46, %v19, 0
    %vm53 = vcmask 1044480
    %v55 = vsel %vm53, %v45, 0
    %57 = vmatpush.msra.mxu0 0.0
    %58 = vmatpush.msra.mxu0 0.0
    %59 = vmatpush.msra.mxu0 0.0
    %60 = vmatpush.msra.mxu0 0.0
    %61 = vmatpush.msra.mxu0 0.0
    %62 = vmatpush.msra.mxu0 0.0
    %63 = vmatpush.msra.mxu0 0.0
    %64 = vmatpush.msra.mxu0 0.0
    %65 = vmatpush.msra.mxu0 0.0
    %66 = vmatpush.msra.mxu0 0.0
    %67 = vmatpush.msra.mxu0 0.0
    %68 = vmatpush.msra.mxu0 0.0
    %69 = vmatpush.msra.mxu0 0.0
    %70 = vmatpush.msra.mxu0 0.0
    %71 = vmatpush.msra.mxu0 %v55
    %72 = vmatpush.msra.mxu0 %v44
    %73 = vmatmul.f32.gmra.mxu0 %v48
    %v74 = vpop.f32.mrf.mxu0
    %v75 = vadd.f32 0.0, %v74
    %76 = vmatmul.f32.gmra.mxu0 %v51
    %v77 = vpop.f32.mrf.mxu0
    %v78 = vadd.f32 0.0, %v77
    %79 = vdwg.mxu0
    %vm80 = vcmask 523264
    %v82 = vsel %vm80, %v34, 0
    %v85 = vsel %vm80, %v35, 0
    %87 = vmatpush.msra.mxu0 0.0
    %88 = vmatpush.msra.mxu0 0.0
    %89 = vmatpush.msra.mxu0 0.0
    %90 = vmatpush.msra.mxu0 0.0
    %91 = vmatpush.msra.mxu0 0.0
    %92 = vmatpush.msra.mxu0 0.0
    %93 = vmatpush.msra.mxu0 0.0
    %94 = vmatpush.msra.mxu0 0.0
    %95 = vmatpush.msra.mxu0 %v43
    %96 = vmatpush.msra.mxu0 %v42
    %97 = vmatpush.msra.mxu0 %v41
    %98 = vmatpush.msra.mxu0 %v40
    %99 = vmatpush.msra.mxu0 %v39
    %100 = vmatpush.msra.mxu0 %v38
    %101 = vmatpush.msra.mxu0 %v37
    %102 = vmatpush.msra.mxu0 %v36
    %103 = vmatmul.f32.gmra.mxu0 %v82
    %v104 = vpop.f32.mrf.mxu0
    %v105 = vadd.f32 %v75, %v104
    %106 = vmatmul.f32.gmra.mxu0 %v85
    %v107 = vpop.f32.mrf.mxu0
    %v108 = vadd.f32 %v78, %v107
    %109 = vdwg.mxu0
    %v110 = vld [vmem:[%s3] sm:$0x1]
    %v112 = vperm.slane %v110, 0
    %v114 = vadd.f32 %v105, %v112
    %v115 = vadd.f32 %v108, %v112
    %116 = vset.pattern.permute.xlu0 0
    %117 = vperm.xlu0 %116, %v18
    %v118 = vpop.permute.xlu0 %117
    %120 = vset.pattern.permute.xlu0 0
    %121 = vperm.xlu0 %120, %v19
    %v122 = vpop.permute.xlu0 %121
    %v124 = vmul.f32 %v114, %v118
    %v125 = vmul.f32 %v115, %v122
    %vm126 = vcmask 261120
    %127 = vst.msk [vmem:[#allocation2] sm:$0xff] %vm126, %v124
    %128 = vst.msk [vmem:[#allocation2 + $0x8] sm:$0xff] %vm126, %v125
    // Predicated region
    $region18: #{tpu_custom_call.1} parent=1 // pred_check
      _
    $region19: #{tpu_custom_call.1} parent=1 // pred_check_branch
      %130 = sbr.rel (0) target = $region21
    $region20: #{tpu_custom_call.1} parent=1 // pred_region
      %132 = vsyncadd [#allocation3], 0
      %s133 = sshll.u32 [#allocation2], 4
      %s134 = int_to_ptr.vmem [resolvable:$true] %s133
      %s135 = sshll.u32 %s4, 4
      %s136 = int_to_ptr.hbm [resolvable:$true] %s135
      %141 = dma.vmem_to_hbm [thread:$0]  %s134, 256, %s136, [#allocation3], 128, 128, 8
    $region21: #{tpu_custom_call.1} parent=1 // pred_fallthru
      _
    // Predicated region
    $region22: #{tpu_custom_call.1} parent=1 // pred_check
      _
    $region23: #{tpu_custom_call.1} parent=1 // pred_check_branch
      %143 = sbr.rel (0) target = $region25
    $region24: #{tpu_custom_call.1} parent=1 // pred_region
      %145 = dma.done [#allocation3], 256
    $region25: #{tpu_custom_call.1} parent=1 // pred_fallthru
      _
    %146 = vsyncpa [#allocation3], 1

</llo_original>
